<compile_context>
chip_gen: v5e
topology: v5e:2x2
jax: 0.10.0
libtpu: 0.0.40
codegen_flags: <defaults>
</compile_context>

<pallas_src>
import jax
import jax.numpy as jnp
from jax.experimental import pallas as pl
from jax.experimental.pallas import tpu as pltpu


def _group_all_kernel(xyz_ref, feat_ref, out_ref):
    # xyz_ref : (bt, 3,   tn)  pre-transposed xyz tile
    # feat_ref: (bt, C,   tn)  feature tile
    # out_ref : (bt, C+3, tn)  output tile
    # Two direct slice stores: no concatenate temporary, no in-kernel transpose.
    out_ref[:, 0:3, :] = xyz_ref[...]
    out_ref[:, 3:, :] = feat_ref[...]


def _round_up(x, m):
    return ((x + m - 1) // m) * m


def _sublane(itemsize):
    # f32 vregs hold 8 sublanes; sub-32-bit dtypes pack more rows per vreg.
    return max(8, (8 * 4) // itemsize)


def _block_bytes(bt, rows, tn, itemsize):
    """VMEM bytes of one (bt, rows, tn) block including sublane/lane padding."""
    sub = _sublane(itemsize)
    return bt * _round_up(rows, sub) * _round_up(tn, 128) * itemsize


def _tiles_bytes(bt, tn, c, itemsize):
    """Total double-buffered VMEM footprint of the xyz + feature + out blocks."""
    per = (_block_bytes(bt, 3, tn, itemsize)
           + _block_bytes(bt, c, tn, itemsize)
           + _block_bytes(bt, c + 3, tn, itemsize))
    return 2 * per


def _vmem_capacity_bytes():
    try:
        return int(pltpu.get_tpu_info().vmem_capacity_bytes)
    except Exception:
        return 64 * 1024 * 1024        # conservative: v7x per-TensorCore VMEM


def _choose_tiles(b, n, c, itemsize, budget):
    """Pick (batch_tile, n_tile) so each grid step moves the largest legal block."""
    # 1) Largest lane-dense N tile whose double-buffered blocks fit the budget.
    if _tiles_bytes(1, n, c, itemsize) <= budget:
        tn = n
    else:
        sub = _sublane(itemsize)
        per_lane = 2 * (_round_up(3, sub) + _round_up(c, sub)
                        + _round_up(c + 3, sub)) * itemsize
        lanes = max(128, budget // per_lane)
        tn = max(128, (lanes // 128) * 128)
        tn = min(tn, n)

    # 2) If the whole point axis fits in one tile, fold batches into the block
    #    (bigger DMAs, fewer grid steps; amortizes ~0.35us fixed per-step cost).
    bt = 1
    if tn == n:
        for cand in range(b, 0, -1):
            if b % cand == 0 and _tiles_bytes(cand, n, c, itemsize) <= budget:
                bt = cand
                break

    # 3) Megacore: if the grid would collapse to a single step but the problem
    #    is big enough to care, force >=2 blocks so both v7x TCs stream.
    out_bytes = b * (c + 3) * n * itemsize
    if (b // bt) * pl.cdiv(n, tn) < 2 and out_bytes >= (2 << 20):
        if bt > 1:
            for cand in range(bt // 2, 0, -1):     # largest proper divisor of B
                if b % cand == 0:
                    bt = cand
                    break
        elif n >= 256:
            tn = max(128, _round_up(pl.cdiv(n, 2), 128))
    return bt, tn


def group_all(xyz, new_xyz=None, features=None, use_xyz=True, tile_n=None):
    """Pallas implementation of GroupAll.forward.

    Args:
      xyz:      (B, N, 3) float array.
      new_xyz:  ignored (kept for API parity with the PyTorch module).
      features: optional (B, C, N) float array.
      use_xyz:  whether to prepend the (transposed) xyz coordinates.
      tile_n:   optional override of the N tile size (testing / tuning).

    Returns:
      (B, C+3, 1, N) if features is not None and use_xyz else
      (B, C,   1, N) if features is not None and not use_xyz else
      (B, 3,   1, N)
    """
    del new_xyz
    B, N, _ = xyz.shape

    if features is None:
        # Tiny (B, N, 3) transpose; plain XLA is at least as good as a kernel.
        return jnp.swapaxes(xyz, 1, 2)[:, :, None, :]

    if not use_xyz:
        # grouped_features = features.unsqueeze(2); pure reshape, no compute.
        return features[:, :, None, :]

    C = features.shape[1]
    # Match the reference concatenate's type promotion; avoids a dtype
    # mismatch between the out_shape and the in-kernel feature store.
    out_dtype = jnp.promote_types(xyz.dtype, features.dtype)
    xyz = xyz.astype(out_dtype)
    features = features.astype(out_dtype)
    itemsize = jnp.dtype(out_dtype).itemsize

    cap = _vmem_capacity_bytes()
    # Generation-aware block budget: half of physical VMEM, never above 48 MiB.
    budget = min(cap // 2, 48 * 1024 * 1024)

    if tile_n is not None:
        bt, tn = 1, int(tile_n)
    else:
        bt, tn = _choose_tiles(B, N, C, itemsize, budget)

    b_tiles = B // bt
    n_tiles = pl.cdiv(N, tn)

    # Explicit scoped-VMEM limit: actual double-buffered footprint + headroom,
    # clamped below physical capacity (respects v5e's 16 MiB default and v7x's
    # 64 MiB physical VMEM without shrinking the tile).
    footprint = _tiles_bytes(bt, tn, C, itemsize)
    vmem_limit = int(min(cap - (4 << 20), max(16 << 20, footprint + (8 << 20))))

    # Do the tiny (N,3)->(3,N) relayout once in XLA so the kernel only sees
    # channel-major, lane-dense blocks.
    xyz_t = jnp.swapaxes(xyz, 1, 2)                    # (B, 3, N)

    cost = pl.CostEstimate(
        flops=0,
        transcendentals=0,
        bytes_accessed=int(2 * B * (C + 3) * N * itemsize))

    out = pl.pallas_call(
        _group_all_kernel,
        out_shape=jax.ShapeDtypeStruct((B, C + 3, N), out_dtype),
        grid_spec=pltpu.PrefetchScalarGridSpec(
            num_scalar_prefetch=0,
            grid=(b_tiles, n_tiles),
            in_specs=[
                pl.BlockSpec((bt, 3, tn), lambda b, n: (b, 0, n)),
                pl.BlockSpec((bt, C, tn), lambda b, n: (b, 0, n)),
            ],
            out_specs=pl.BlockSpec((bt, C + 3, tn), lambda b, n: (b, 0, n)),
        ),
        compiler_params=pltpu.CompilerParams(
            dimension_semantics=("parallel", "parallel"),
            vmem_limit_bytes=vmem_limit),
        cost_estimate=cost,
    )(xyz_t, features)
    return out[:, :, None, :]                          # (B, C+3, 1, N)


def _reference(xyz, features, use_xyz=True):
    grouped_xyz = jnp.transpose(xyz, (0, 2, 1))[:, :, None, :]
    if features is not None:
        grouped_features = features[:, :, None, :]
        if use_xyz:
            return jnp.concatenate([grouped_xyz, grouped_features], axis=1)
        return grouped_features
    return grouped_xyz


if __name__ == "__main__":
    key = jax.random.PRNGKey(0)
    k1, k2, k3, k4, k5, k6, k7 = jax.random.split(key, 7)

    # Small shapes consistent with the module: B=2, N=16, C=4.
    B, N, C = 2, 16, 4
    xyz = jax.random.normal(k1, (B, N, 3), dtype=jnp.float32)
    new_xyz = jax.random.normal(k2, (B, 1, 3), dtype=jnp.float32)   # ignored
    features = jax.random.normal(k3, (B, C, N), dtype=jnp.float32)

    out = jax.block_until_ready(group_all(xyz, new_xyz, features, use_xyz=True))
    ref = _reference(xyz, features, use_xyz=True)
    assert out.shape == (B, C + 3, 1, N), out.shape
    assert jnp.allclose(out, ref, atol=1e-6), "mismatch vs reference (use_xyz=True)"

    # use_xyz=False path (pure reshape in XLA).
    out_nf = jax.block_until_ready(group_all(xyz, new_xyz, features, use_xyz=False))
    assert jnp.allclose(out_nf, _reference(xyz, features, use_xyz=False), atol=1e-6)

    # features=None path (plain XLA transpose).
    out_x = jax.block_until_ready(group_all(xyz, new_xyz, None))
    assert jnp.allclose(out_x, _reference(xyz, None), atol=1e-6)

    # Larger lane-dense shape exercising the multi-tile (pipelined) path.
    B2, N2, C2 = 2, 384, 8
    xyz2 = jax.random.normal(k4, (B2, N2, 3), dtype=jnp.float32)
    feat2 = jax.random.normal(k5, (B2, C2, N2), dtype=jnp.float32)
    out2 = jax.block_until_ready(
        group_all(xyz2, None, feat2, use_xyz=True, tile_n=128))
    assert out2.shape == (B2, C2 + 3, 1, N2), out2.shape
    assert jnp.allclose(out2, _reference(xyz2, feat2, use_xyz=True), atol=1e-6)

    # Auto-tiled path that folds batches into the block (single-tile N).
    B3, N3, C3 = 4, 256, 16
    xyz3 = jax.random.normal(k6, (B3, N3, 3), dtype=jnp.bfloat16)
    feat3 = jax.random.normal(k7, (B3, C3, N3), dtype=jnp.bfloat16)
    out3 = jax.block_until_ready(group_all(xyz3, None, feat3, use_xyz=True))
    assert out3.shape == (B3, C3 + 3, 1, N3), out3.shape
    assert jnp.allclose(out3.astype(jnp.float32),
                        _reference(xyz3, feat3, use_xyz=True).astype(jnp.float32),
                        atol=1e-2)

    print("KERNEL_OK")
</pallas_src>

<mosaic_0001>
module attributes {stable_mosaic.version = 11 : i64} {
  func.func @_group_all_kernel(%arg0: i32, %arg1: i32, %arg2: memref<2x3x16xf32, #tpu.memory_space<vmem>>, %arg3: memref<2x4x16xf32, #tpu.memory_space<vmem>>, %arg4: memref<2x7x16xf32, #tpu.memory_space<vmem>>) attributes {dimension_semantics = [#tpu.dimension_semantics<parallel>, #tpu.dimension_semantics<parallel>], iteration_bounds = array<i64: 1, 1>, scalar_prefetch = 0 : i64, scratch_operands = 0 : i64, tpu.core_type = #tpu.core_type<tc>, window_params = [{transform_indices = @transform_0, window_bounds = array<i64: 2, 3, 16>}, {transform_indices = @transform_1, window_bounds = array<i64: 2, 4, 16>}, {transform_indices = @transform_2, window_bounds = array<i64: 2, 7, 16>}]} {
    %c0 = arith.constant 0 : index
    %c0_0 = arith.constant 0 : index
    %c0_1 = arith.constant 0 : index
    %0 = vector.load %arg2[%c0, %c0_0, %c0_1] : memref<2x3x16xf32, #tpu.memory_space<vmem>>, vector<2x3x16xf32>
    %c0_2 = arith.constant 0 : index
    %c0_3 = arith.constant 0 : index
    %c0_4 = arith.constant 0 : index
    %1 = vector.load %arg4[%c0_2, %c0_3, %c0_4] : memref<2x7x16xf32, #tpu.memory_space<vmem>>, vector<2x3x16xf32>
    tpu.vector_store %arg4[%c0_2, %c0_3, %c0_4], %0 {strides = array<i32>} : memref<2x7x16xf32, #tpu.memory_space<vmem>>, vector<2x3x16xf32>,
    %c0_5 = arith.constant 0 : index
    %c0_6 = arith.constant 0 : index
    %c0_7 = arith.constant 0 : index
    %2 = vector.load %arg3[%c0_5, %c0_6, %c0_7] : memref<2x4x16xf32, #tpu.memory_space<vmem>>, vector<2x4x16xf32>
    %c0_8 = arith.constant 0 : index
    %c3 = arith.constant 3 : index
    %c0_9 = arith.constant 0 : index
    %3 = vector.load %arg4[%c0_8, %c3, %c0_9] : memref<2x7x16xf32, #tpu.memory_space<vmem>>, vector<2x4x16xf32>
    tpu.vector_store %arg4[%c0_8, %c3, %c0_9], %2 {strides = array<i32>} : memref<2x7x16xf32, #tpu.memory_space<vmem>>, vector<2x4x16xf32>,
    return
  }
  func.func @transform_0(%arg0: i32, %arg1: i32) -> (i32, i32, i32) {
    %c0_i32 = arith.constant 0 : i32
    %c0_i32_0 = arith.constant 0 : i32
    return %arg0, %c0_i32, %arg1 : i32, i32, i32
  }
  func.func @transform_1(%arg0: i32, %arg1: i32) -> (i32, i32, i32) {
    %c0_i32 = arith.constant 0 : i32
    %c0_i32_0 = arith.constant 0 : i32
    return %arg0, %c0_i32, %arg1 : i32, i32, i32
  }
  func.func @transform_2(%arg0: i32, %arg1: i32) -> (i32, i32, i32) {
    %c0_i32 = arith.constant 0 : i32
    %c0_i32_0 = arith.constant 0 : i32
    return %arg0, %c0_i32, %arg1 : i32, i32, i32
  }
}

</mosaic_0001>

<llo_original>
// kernel: tpu_custom_call.1
$region0: #{tpu_custom_call.1}
  #allocation0 [shape = 'u32[]', space=smem, size = 0x4, offset = 0x4, fixed_abs, tag = 'smem constant byte address 0x4 - core index']
  #allocation1 [shape = 'u32[72,128]{1,0:T(1,128)}', space=vmem, size = 0x9000, scoped, tag = 'internal scratch']
  %s0 = inlined_call_operand.vmem [shape: f32[2,3,16], index: 0, kind: input, shape index: {}]
  %s1 = inlined_call_operand.vmem [shape: f32[2,4,16], index: 1, kind: input, shape index: {}]
  %s2 = inlined_call_operand.vmem [shape: f32[2,7,16], index: 2, kind: output, shape index: {}]
  %s3 = sld [smem:[#allocation0]]
  $region18: #{tpu_custom_call.1} parent=0
    _
  %s5 = ssub.s32 1, %s3
  %s6 = scalar_select 0, %s5, %s3
  // Predicated region
  $region2: #{tpu_custom_call.1} parent=0 // pred_check
    _
  $region3: #{tpu_custom_call.1} parent=0 // pred_check_branch
    %8 = sbr.rel (0) target = $region5
  $region4: #{tpu_custom_call.1} parent=0 // pred_region
    _
  $region5: #{tpu_custom_call.1} parent=0 // pred_fallthru
    _
  // Predicated region
  $region6: #{tpu_custom_call.1} parent=0 // pred_check
    _
  $region7: #{tpu_custom_call.1} parent=0 // pred_check_branch
    %10 = sbr.rel (0) target = $region9
  $region8: #{tpu_custom_call.1} parent=0 // pred_region
    _
  $region9: #{tpu_custom_call.1} parent=0 // pred_fallthru
    _
  %v11 = vld [vmem:[%s0] sm:$0x7]
  %v12 = vld [vmem:[%s0 + $0x4] sm:$0x7]
  %vm13 = vcmask 124928
  %14 = vst.msk [vmem:[%s2] sm:$0x7] %vm13, %v11
  %15 = vst.msk [vmem:[%s2 + $0x8] sm:$0x7] %vm13, %v12
  %v16 = vld [vmem:[%s1] sm:$0xf]
  %v17 = vld [vmem:[%s1 + $0x4] sm:$0xf]
  %vm18 = vcmask 125952
  %19 = vst.msk [vmem:[%s2 + $0x3] sm:$0xf] %vm18, %v16
  %20 = vst.msk [vmem:[%s2 + $0xb] sm:$0xf] %vm18, %v17
  // Predicated region
  $region10: #{tpu_custom_call.1} parent=0 // pred_check
    _
  $region11: #{tpu_custom_call.1} parent=0 // pred_check_branch
    %22 = sbr.rel (0) target = $region13
  $region12: #{tpu_custom_call.1} parent=0 // pred_region
    _
  $region13: #{tpu_custom_call.1} parent=0 // pred_fallthru
    _
  // Predicated region
  $region14: #{tpu_custom_call.1} parent=0 // pred_check
    _
  $region15: #{tpu_custom_call.1} parent=0 // pred_check_branch
    %24 = sbr.rel (0) target = $region17
  $region16: #{tpu_custom_call.1} parent=0 // pred_region
    _
  $region17: #{tpu_custom_call.1} parent=0 // pred_fallthru
    _

</llo_original>
